<compile_context>
chip_gen: v7x
topology: tpu7x:2x2x1
jax: 0.10.0
libtpu: 0.0.40
codegen_flags: <defaults>
</compile_context>

<pallas_src>
import functools

import jax
import jax.numpy as jnp
from jax.experimental import pallas as pl
from jax.experimental.pallas import tpu as pltpu


def _round_up(v, m):
    return ((v + m - 1) // m) * m


def classifier_kernel(x_ref, w_ref, b_ref, o_ref):
    # x_ref: (TB, D), w_ref: (D, C_pad), b_ref: (1, C_pad), o_ref: (TB, C)
    logits = (
        jnp.dot(x_ref[...], w_ref[...], preferred_element_type=jnp.float32)
        + b_ref[...]
    )
    # Numerically stable softmax over the (padded, lane-dense) class axis.
    # Padded columns carry bias -1e30 and zero weights -> exp(...) == 0 exactly,
    # so they contribute nothing to the denominator.
    m = jnp.max(logits, axis=-1, keepdims=True)
    e = jnp.exp(logits - m)
    denom = jnp.sum(e, axis=-1, keepdims=True)
    probs = e / denom  # exact division (HBM-bound kernel: exact reciprocal is free)
    # Store only the real C columns; the HBM writeback stays contiguous (full last dim
    # of the output array) and the padded columns never leave VMEM.
    o_ref[...] = probs[:, : o_ref.shape[-1]].astype(o_ref.dtype)


def prepare_classifier_params(w, b, *, use_bf16_matmul=False):
    """Pad the Linear parameters once (hoisted out of the per-call forward).

    w: (128, C) f32 (i.e. PyTorch weight.T), b: (C,) f32.
    Returns (w_pad (128, C_pad), b_pad (1, C_pad), C).
    """
    D, C = w.shape
    C_pad = max(128, _round_up(C, 128))
    w_dtype = jnp.bfloat16 if use_bf16_matmul else jnp.float32
    w_pad = jnp.zeros((D, C_pad), dtype=w_dtype).at[:, :C].set(w.astype(w_dtype))
    # Padded bias slots get a large negative (NOT -inf, NOT 0) so exp() underflows to
    # exactly 0 without risking (-inf) - (-inf) NaNs.
    b_pad = (
        jnp.full((1, C_pad), -1e30, dtype=jnp.float32)
        .at[0, :C]
        .set(b.astype(jnp.float32))
    )
    return w_pad, b_pad, C


@functools.partial(
    jax.jit, static_argnames=("num_classes", "tb", "use_bf16_matmul")
)
def classifier_forward(x, w_pad, b_pad, num_classes, *, tb=4096, use_bf16_matmul=False):
    """x: (B, 128), w_pad/b_pad from prepare_classifier_params -> (B, C) softmax probs."""
    B, D = x.shape
    C = num_classes
    C_pad = w_pad.shape[1]

    if use_bf16_matmul:
        x = x.astype(jnp.bfloat16)

    # Batch tile: large enough to amortize the ~0.35us per-grid-step overhead, a
    # multiple of 8 (sublane alignment), and capped at ~half the batch so the grid has
    # at least 2 steps whenever possible (lets "parallel" shard over v7x's 2 TCs).
    TB = min(_round_up(max(tb, 8), 8), max(8, _round_up(pl.cdiv(B, 2), 8)))
    grid = (pl.cdiv(B, TB),)  # ragged last block: OOB tail rows dropped on write

    out = pl.pallas_call(
        classifier_kernel,
        out_shape=jax.ShapeDtypeStruct((B, C), jnp.float32),
        grid_spec=pltpu.PrefetchScalarGridSpec(
            num_scalar_prefetch=0,
            grid=grid,
            in_specs=[
                pl.BlockSpec((TB, D), lambda i: (i, 0)),     # streamed per batch tile
                pl.BlockSpec((D, C_pad), lambda i: (0, 0)),  # resident weight
                pl.BlockSpec((1, C_pad), lambda i: (0, 0)),  # resident bias
            ],
            out_specs=pl.BlockSpec((TB, C), lambda i: (i, 0)),
        ),
        compiler_params=pltpu.CompilerParams(
            dimension_semantics=("parallel",),
        ),
    )(x, w_pad, b_pad)
    return out


if __name__ == "__main__":
    key = jax.random.PRNGKey(0)
    k_x, k_w, k_b, k_x2 = jax.random.split(key, 4)

    in_features = 128
    num_classes = 10

    # Deterministic synthetic parameters (nn.Linear(128, num_classes) shapes).
    # PyTorch stores weight as (out, in); we keep the transposed (in, out) layout.
    w = jax.random.normal(k_w, (in_features, num_classes), dtype=jnp.float32) * 0.05
    b = jax.random.normal(k_b, (num_classes,), dtype=jnp.float32) * 0.01
    w_pad, b_pad, _ = prepare_classifier_params(w, b)

    # --- Small shape consistent with the module's forward ---
    batch = 8
    x = jax.random.normal(k_x, (batch, in_features), dtype=jnp.float32)
    out = jax.block_until_ready(classifier_forward(x, w_pad, b_pad, num_classes))
    ref = jax.nn.softmax(x @ w + b, axis=1)
    assert out.shape == (batch, num_classes)
    assert jnp.allclose(out, ref, atol=1e-4, rtol=1e-4)
    assert jnp.allclose(jnp.sum(out, axis=1), 1.0, atol=1e-4)

    # --- Larger, non-tile-aligned batch to exercise tiling + ragged last block ---
    batch2 = 700
    x2 = jax.random.normal(k_x2, (batch2, in_features), dtype=jnp.float32)
    out2 = jax.block_until_ready(classifier_forward(x2, w_pad, b_pad, num_classes))
    ref2 = jax.nn.softmax(x2 @ w + b, axis=1)
    assert out2.shape == (batch2, num_classes)
    assert jnp.allclose(out2, ref2, atol=1e-4, rtol=1e-4)
    assert jnp.allclose(jnp.sum(out2, axis=1), 1.0, atol=1e-4)

    print("KERNEL_OK")
</pallas_src>

<mosaic_0001>
module attributes {stable_mosaic.version = 11 : i64} {
  func.func @classifier_kernel(%arg0: i32, %arg1: memref<8x128xf32, #tpu.memory_space<vmem>>, %arg2: memref<128x128xf32, #tpu.memory_space<vmem>>, %arg3: memref<1x128xf32, #tpu.memory_space<vmem>>, %arg4: memref<8x10xf32, #tpu.memory_space<vmem>>) attributes {dimension_semantics = [#tpu.dimension_semantics<parallel>], iteration_bounds = array<i64: 1>, scalar_prefetch = 0 : i64, scratch_operands = 0 : i64, tpu.core_type = #tpu.core_type<tc>, window_params = [{transform_indices = @transform_0, window_bounds = array<i64: 8, 128>}, {pipeline_mode = #tpu.pipeline_mode<synchronous>, transform_indices = @transform_1, window_bounds = array<i64: 128, 128>}, {pipeline_mode = #tpu.pipeline_mode<synchronous>, transform_indices = @transform_2, window_bounds = array<i64: 1, 128>}, {transform_indices = @transform_3, window_bounds = array<i64: 8, 10>}]} {
    %c0 = arith.constant 0 : index
    %c0_0 = arith.constant 0 : index
    %0 = vector.load %arg1[%c0, %c0_0] : memref<8x128xf32, #tpu.memory_space<vmem>>, vector<8x128xf32>
    %c0_1 = arith.constant 0 : index
    %c0_2 = arith.constant 0 : index
    %1 = vector.load %arg2[%c0_1, %c0_2] : memref<128x128xf32, #tpu.memory_space<vmem>>, vector<128x128xf32>
    %cst = arith.constant dense<0.000000e+00> : vector<8x128xf32>
    %2 = tpu.matmul %0, %1, %cst {dimension_numbers = #tpu.dot_dimension_numbers<[1], [0], [0], [1], [0, 0, 1, 1], [], []>} : vector<8x128xf32>, vector<128x128xf32>, vector<8x128xf32> -> vector<8x128xf32>
    %c0_3 = arith.constant 0 : index
    %c0_4 = arith.constant 0 : index
    %3 = vector.load %arg3[%c0_3, %c0_4] : memref<1x128xf32, #tpu.memory_space<vmem>>, vector<1x128xf32>
    %4 = vector.broadcast %3 : vector<1x128xf32> to vector<8x128xf32>
    %5 = arith.addf %2, %4 : vector<8x128xf32>
    %cst_5 = arith.constant dense<0xFF800000> : vector<8xf32>
    %6 = vector.multi_reduction <maximumf>, %5, %cst_5 [1] : vector<8x128xf32> to vector<8xf32>
    %7 = vector.shape_cast %6 : vector<8xf32> to vector<8x1xf32>
    %8 = vector.broadcast %7 : vector<8x1xf32> to vector<8x128xf32>
    %9 = arith.subf %5, %8 : vector<8x128xf32>
    %10 = math.exp %9 : vector<8x128xf32>
    %cst_6 = arith.constant dense<0.000000e+00> : vector<8xf32>
    %11 = vector.multi_reduction <add>, %10, %cst_6 [1] : vector<8x128xf32> to vector<8xf32>
    %12 = vector.shape_cast %11 : vector<8xf32> to vector<8x1xf32>
    %13 = vector.broadcast %12 : vector<8x1xf32> to vector<8x128xf32>
    %14 = arith.divf %10, %13 : vector<8x128xf32>
    %15 = vector.extract_strided_slice %14 {offsets = [0, 0], sizes = [8, 10], strides = [1, 1]} : vector<8x128xf32> to vector<8x10xf32>
    %c0_7 = arith.constant 0 : index
    %c0_8 = arith.constant 0 : index
    %16 = vector.load %arg4[%c0_7, %c0_8] : memref<8x10xf32, #tpu.memory_space<vmem>>, vector<8x10xf32>
    tpu.vector_store %arg4[%c0_7, %c0_8], %15 {strides = array<i32>} : memref<8x10xf32, #tpu.memory_space<vmem>>, vector<8x10xf32>,
    return
  }
  func.func @transform_0(%arg0: i32) -> (i32, i32) {
    %c0_i32 = arith.constant 0 : i32
    %c0_i32_0 = arith.constant 0 : i32
    return %arg0, %c0_i32 : i32, i32
  }
  func.func @transform_1(%arg0: i32) -> (i32, i32) {
    %c0_i32 = arith.constant 0 : i32
    %c0_i32_0 = arith.constant 0 : i32
    %c0_i32_1 = arith.constant 0 : i32
    return %c0_i32, %c0_i32_0 : i32, i32
  }
  func.func @transform_2(%arg0: i32) -> (i32, i32) {
    %c0_i32 = arith.constant 0 : i32
    %c0_i32_0 = arith.constant 0 : i32
    %c0_i32_1 = arith.constant 0 : i32
    return %c0_i32, %c0_i32_0 : i32, i32
  }
  func.func @transform_3(%arg0: i32) -> (i32, i32) {
    %c0_i32 = arith.constant 0 : i32
    %c0_i32_0 = arith.constant 0 : i32
    return %arg0, %c0_i32 : i32, i32
  }
}

</mosaic_0001>

<llo_original>
// kernel: classifier_forward.1
$region0: #{classifier_forward.1}
  #allocation0 [shape = 'u32[]', space=smem, size = 0x4, offset = 0x4, fixed_abs, tag = 'smem constant byte address 0x4 - core index']
  #allocation1 [shape = 'u32[144,128]{1,0:T(1,128)}', space=vmem, size = 0x12000, scoped, tag = 'internal scratch']
  %s0 = inlined_call_operand.hbm [shape: f32[8,128], index: 0, kind: input, shape index: {}]
  %s1 = inlined_call_operand.hbm [shape: f32[128,128], index: 1, kind: input, shape index: {}]
  %s2 = inlined_call_operand.vmem [shape: f32[1,128], index: 2, kind: input, shape index: {}]
  %s3 = inlined_call_operand.hbm [shape: f32[8,10], index: 3, kind: output, shape index: {}]
  %s4 = sld [smem:[#allocation0]]
  $region30: #{classifier_forward.1} parent=0
    _
  %s6 = ssub.s32 1, %s4
  %s7 = scalar_select 0, %s6, %s4
  $region1: #{classifier_forward.1} parent=0
    #allocation2 [shape = 'u8[4096]{0}', space=vmem, size = 0x1000, scoped, tag = 'input window, operand 0, single buffered']
    #allocation3 [shape = 's32[1]{0}', space=sflag, size = 0x4, scoped, tag = 'scoped memory for classifier_forward.1']
    #allocation4 [shape = 's32[1]{0}', space=sflag, size = 0x4, scoped, tag = 'scoped memory for classifier_forward.1']
    #allocation5 [shape = 'u8[65536]{0}', space=vmem, size = 0x10000, scoped, tag = 'input window, operand 1, single buffered']
    #allocation6 [shape = 's32[1]{0}', space=sflag, size = 0x4, scoped, tag = 'scoped memory for classifier_forward.1']
    #allocation7 [shape = 'u8[4096]{0}', space=vmem, size = 0x1000, scoped, tag = 'output window, operand 0, single buffered']
    %8 = vsyncpa [#allocation3], 0
    %9 = vsyncpa [#allocation6], 0
    %10 = vsyncpa [#allocation4], 0
    // Predicated region
    $region2: #{classifier_forward.1} parent=1 // pred_check
      _
    $region3: #{classifier_forward.1} parent=1 // pred_check_branch
      %12 = sbr.rel (0) target = $region5
    $region4: #{classifier_forward.1} parent=1 // pred_region
      %s14 = ssub.s32 128, 128
      %15 = vsyncadd [#allocation3], %s14
      %s17 = sshll.u32 [#allocation2], 4
      %s18 = int_to_ptr.vmem [resolvable:$true] %s17
      %20 = dma.hbm_to_vmem [thread:$0]  %s0, 128, %s18, [#allocation3]
    $region5: #{classifier_forward.1} parent=1 // pred_fallthru
      _
    // Predicated region
    $region6: #{classifier_forward.1} parent=1 // pred_check
      _
    $region7: #{classifier_forward.1} parent=1 // pred_check_branch
      %22 = sbr.rel (0) target = $region9
    $region8: #{classifier_forward.1} parent=1 // pred_region
      %s24 = ssub.s32 2048, 2048
      %25 = vsyncadd [#allocation6], %s24
      %s26 = sshll.u32 [#allocation5], 4
      %s27 = int_to_ptr.vmem [resolvable:$true] %s26
      %32 = dma.hbm_to_vmem [thread:$0]  %s1, 2048, %s27, [#allocation6], 128, 128, 8
    $region9: #{classifier_forward.1} parent=1 // pred_fallthru
      _
    // Predicated region
    $region10: #{classifier_forward.1} parent=1 // pred_check
      _
    $region11: #{classifier_forward.1} parent=1 // pred_check_branch
      %34 = sbr.rel (0) target = $region13
    $region12: #{classifier_forward.1} parent=1 // pred_region
      _
    $region13: #{classifier_forward.1} parent=1 // pred_fallthru
      _
    // Predicated region
    $region14: #{classifier_forward.1} parent=1 // pred_check
      _
    $region15: #{classifier_forward.1} parent=1 // pred_check_branch
      %36 = sbr.rel (0) target = $region17
    $region16: #{classifier_forward.1} parent=1 // pred_region
      %37 = dma.done [#allocation3], 128
    $region17: #{classifier_forward.1} parent=1 // pred_fallthru
      _
    // Predicated region
    $region18: #{classifier_forward.1} parent=1 // pred_check
      _
    $region19: #{classifier_forward.1} parent=1 // pred_check_branch
      %39 = sbr.rel (0) target = $region21
    $region20: #{classifier_forward.1} parent=1 // pred_region
      %40 = dma.done [#allocation6], 2048
    $region21: #{classifier_forward.1} parent=1 // pred_fallthru
      _
    %v41 = vld [vmem:[#allocation2] sm:$0xff]
    %v42 = vld [vmem:[#allocation5] sm:$0xff]
    %v43 = vld [vmem:[#allocation5 + $0x8] sm:$0xff]
    %v44 = vld [vmem:[#allocation5 + $0x10] sm:$0xff]
    %v45 = vld [vmem:[#allocation5 + $0x18] sm:$0xff]
    %v46 = vld [vmem:[#allocation5 + $0x20] sm:$0xff]
    %v47 = vld [vmem:[#allocation5 + $0x28] sm:$0xff]
    %v48 = vld [vmem:[#allocation5 + $0x30] sm:$0xff]
    %v49 = vld [vmem:[#allocation5 + $0x38] sm:$0xff]
    %v50 = vld [vmem:[#allocation5 + $0x40] sm:$0xff]
    %v51 = vld [vmem:[#allocation5 + $0x48] sm:$0xff]
    %v52 = vld [vmem:[#allocation5 + $0x50] sm:$0xff]
    %v53 = vld [vmem:[#allocation5 + $0x58] sm:$0xff]
    %v54 = vld [vmem:[#allocation5 + $0x60] sm:$0xff]
    %v55 = vld [vmem:[#allocation5 + $0x68] sm:$0xff]
    %v56 = vld [vmem:[#allocation5 + $0x70] sm:$0xff]
    %v57 = vld [vmem:[#allocation5 + $0x78] sm:$0xff]
    %v58 = vld [vmem:[%s2] sm:$0x1]
    %v60 = vlaneseq
    %v61 = vshrl.u32 %v60, 7
    %v62 = vsub.s32 0, %v61
    %v63 = vrot.slane %v58, %v62
    %65 = vmatprep.subr.mxu0 0.0
    %66 = vmatpush1.msra.mxu0 %v42
    %67 = vmatprep.subr.mxu0 0.0
    %68 = vmatpush1.msra.mxu0 %v43
    %69 = vmatprep.subr.mxu0 0.0
    %70 = vmatpush1.msra.mxu0 %v44
    %71 = vmatprep.subr.mxu0 0.0
    %72 = vmatpush1.msra.mxu0 %v45
    %73 = vmatprep.subr.mxu0 0.0
    %74 = vmatpush1.msra.mxu0 %v46
    %75 = vmatprep.subr.mxu0 0.0
    %76 = vmatpush1.msra.mxu0 %v47
    %77 = vmatprep.subr.mxu0 0.0
    %78 = vmatpush1.msra.mxu0 %v48
    %79 = vmatprep.subr.mxu0 0.0
    %80 = vmatpush1.msra.mxu0 %v49
    %81 = vmatprep.subr.mxu0 0.0
    %82 = vmatpush1.msra.mxu0 %v50
    %83 = vmatprep.subr.mxu0 0.0
    %84 = vmatpush1.msra.mxu0 %v51
    %85 = vmatprep.subr.mxu0 0.0
    %86 = vmatpush1.msra.mxu0 %v52
    %87 = vmatprep.subr.mxu0 0.0
    %88 = vmatpush1.msra.mxu0 %v53
    %89 = vmatprep.subr.mxu0 0.0
    %90 = vmatpush1.msra.mxu0 %v54
    %91 = vmatprep.subr.mxu0 0.0
    %92 = vmatpush1.msra.mxu0 %v55
    %93 = vmatprep.subr.mxu0 0.0
    %94 = vmatpush1.msra.mxu0 %v56
    %95 = vmatprep.subr.mxu0 0.0
    %96 = vmatpush1.msra.mxu0 %v57
    %97 = vmatprep.subr.mxu0 0.0
    %98 = vmatpush1.msra.mxu0 0.0
    %99 = vmatprep.subr.mxu0 0.0
    %100 = vmatpush1.msra.mxu0 0.0
    %101 = vmatprep.subr.mxu0 0.0
    %102 = vmatpush1.msra.mxu0 0.0
    %103 = vmatprep.subr.mxu0 0.0
    %104 = vmatpush1.msra.mxu0 0.0
    %105 = vmatprep.subr.mxu0 0.0
    %106 = vmatpush1.msra.mxu0 0.0
    %107 = vmatprep.subr.mxu0 0.0
    %108 = vmatpush1.msra.mxu0 0.0
    %109 = vmatprep.subr.mxu0 0.0
    %110 = vmatpush1.msra.mxu0 0.0
    %111 = vmatprep.subr.mxu0 0.0
    %112 = vmatpush1.msra.mxu0 0.0
    %113 = vmatprep.subr.mxu0 0.0
    %114 = vmatpush1.msra.mxu0 0.0
    %115 = vmatprep.subr.mxu0 0.0
    %116 = vmatpush1.msra.mxu0 0.0
    %117 = vmatprep.subr.mxu0 0.0
    %118 = vmatpush1.msra.mxu0 0.0
    %119 = vmatprep.subr.mxu0 0.0
    %120 = vmatpush1.msra.mxu0 0.0
    %121 = vmatprep.subr.mxu0 0.0
    %122 = vmatpush1.msra.mxu0 0.0
    %123 = vmatprep.subr.mxu0 0.0
    %124 = vmatpush1.msra.mxu0 0.0
    %125 = vmatprep.subr.mxu0 0.0
    %126 = vmatpush1.msra.mxu0 0.0
    %127 = vmatprep.subr.mxu0 0.0
    %128 = vmatpush1.msra.mxu0 0.0
    %129 = vmatprep.mubr.f32.mxu0 0.0
    %130 = vmatmul.mubr.f32.gmra.mrb[0].mxu0 %v41
    %v131 = vpop.f32.mrb[0].mxu0
    %v132 = vadd.f32 %v63, %v131
    %v133 = vpop.f32.mrb[0].mxu0
    %134 = vdwg.mxu0
    %135 = vmax.xlane.f32.xlu0 %v132
    %v136 = vpop.xlane.xlu0 %135
    %v137 = vsub.f32 %v132, %v136
    %v138 = vmul.f32 %v137, 1.442695
    %v139 = vpow.pop %v138
    %140 = vadd.xlane.f32.xlu0 %v139
    %v141 = vpop.xlane.xlu0 %140
    %v142 = vrcp.pop %v141
    %v143 = vmul.f32 %v139, %v142
    %vm144 = vcmask 80896
    %145 = vst.msk [vmem:[#allocation7] sm:$0xff] %vm144, %v143
    // Predicated region
    $region22: #{classifier_forward.1} parent=1 // pred_check
      _
    $region23: #{classifier_forward.1} parent=1 // pred_check_branch
      %147 = sbr.rel (0) target = $region25
    $region24: #{classifier_forward.1} parent=1 // pred_region
      %s149 = ssub.s32 128, 128
      %150 = vsyncadd [#allocation4], %s149
      %s152 = sshll.u32 [#allocation7], 4
      %s153 = int_to_ptr.vmem [resolvable:$true] %s152
      %155 = dma.vmem_to_hbm [thread:$0]  %s153, 128, %s3, [#allocation4]
    $region25: #{classifier_forward.1} parent=1 // pred_fallthru
      _
    // Predicated region
    $region26: #{classifier_forward.1} parent=1 // pred_check
      _
    $region27: #{classifier_forward.1} parent=1 // pred_check_branch
      %157 = sbr.rel (0) target = $region29
    $region28: #{classifier_forward.1} parent=1 // pred_region
      %158 = dma.done [#allocation4], 128
    $region29: #{classifier_forward.1} parent=1 // pred_fallthru
      _
    %159 = vsyncpa [#allocation3], 1
    %160 = vsyncpa [#allocation6], 1
    %161 = vsyncpa [#allocation4], 1

</llo_original>
